<compile_context>
chip_gen: v7x
topology: tpu7x:2x2x1
jax: 0.10.0
libtpu: 0.0.40
codegen_flags: <defaults>
</compile_context>

<pallas_src>
import jax
import jax.numpy as jnp
from jax import lax
from jax.experimental import pallas as pl
from jax.experimental.pallas import tpu as pltpu


def _round_up(x, m):
    return ((x + m - 1) // m) * m


def _choose_tiles(qo, halo, n_batch, per_lane_bytes, budget_bytes):
    """Pick (main tile TS, halo tile TSH, number of spatial tiles).

    TS is a multiple of TSH (itself a multiple of 128) so both views stay lane-dense.
    TS is derived from a VMEM byte budget rather than a fixed cap, never exceeds the
    (rounded-up) spatial extent, and is halved when N == 1 so a v7x chip's two
    TensorCores both get grid steps.
    """
    tsh = _round_up(max(halo, 1), 128)
    ts = max(tsh, (budget_bytes // per_lane_bytes) // tsh * tsh)
    ts = min(ts, _round_up(qo, tsh))
    if n_batch == 1 and qo > tsh:
        ts = min(ts, max(tsh, _round_up(-(-qo // 2), tsh)))
    num_tiles = -(-qo // ts)
    return ts, tsh, num_tiles


def _make_conv_kernel(ts, cin_p, tap_offsets):
    """Fused im2col + single matmul for one (batch, spatial-tile) grid step."""

    def kernel(xa_ref, xb_ref, w_ref, b_ref, o_ref, buf_ref, slab_ref):
        # Stage main tile + halo tile contiguously in VMEM (bf16 -> f32).
        buf_ref[:, :ts] = xa_ref[...].astype(jnp.float32)
        buf_ref[:, ts:] = xb_ref[...].astype(jnp.float32)
        # Fused im2col: each tap is a static lane-shifted slice of the staged buffer,
        # written at a sublane-tile-aligned row offset (cin_p is a multiple of 8).
        for t, d in enumerate(tap_offsets):
            slab_ref[t * cin_p:(t + 1) * cin_p, :] = buf_ref[:, d:d + ts]
        # ONE MXU contraction over all K*K*Cin_pad rows, f32 accumulation; output tile is
        # lane-dense (last dim = TS, a multiple of 128) -> unmasked stores.
        acc = jnp.dot(w_ref[...], slab_ref[...], preferred_element_type=jnp.float32)
        o_ref[...] = (acc + b_ref[...]).astype(o_ref.dtype)

    return kernel


def bblock_forward(x_nchw, weight_oihw, bias, kernel_size,
                   *, in_dtype=jnp.bfloat16,
                   vmem_block_budget=20 * 1024 * 1024,   # live-block sizing budget
                   vmem_limit=32 * 1024 * 1024):         # <= scoped default on v6e/v7x, raises v5e's 16 MiB
    """Equivalent of BBlock(...).forward(x) with batchNorm_type=0, act=None."""
    N, Cin, H, W = x_nchw.shape
    Cout = weight_oihw.shape[0]
    K = kernel_size
    p = K // 2

    # Output spatial size matches nn.Conv2d(padding=K//2) exactly (handles even K too).
    Ho = H + 2 * p - K + 1
    Wo = W + 2 * p - K + 1
    Hp = Ho + K - 1               # padded height actually read
    Wp = Wo + K - 1               # padded width / row stride of the flattened image

    CIN_P = _round_up(Cin, 8)     # sublane-aligned channel group (zero-padded channels)
    KKC = K * K * CIN_P

    Qo = Ho * Wp                  # over-complete flat spatial extent (wrap cols cropped later)
    halo = (K - 1) * Wp + (K - 1)  # largest static tap offset

    out_dtype = x_nchw.dtype
    out_isz = jnp.dtype(out_dtype).itemsize
    in_isz = jnp.dtype(in_dtype).itemsize

    per_lane = (2 * CIN_P * in_isz      # main input block, double buffered
                + CIN_P * 4             # f32 staging buffer (scratch)
                + KKC * 4               # f32 im2col slab (scratch)
                + 2 * Cout * out_isz    # output block, double buffered
                + Cout * 4)             # f32 matmul accumulator
    TS, TSH, num_tiles = _choose_tiles(Qo, halo, N, per_lane, vmem_block_budget)
    RATIO = TS // TSH
    QT = num_tiles * TS
    QA = QT + TS                  # one extra tile so the staggered halo view never runs off the end

    # --- wrapper-side prep: zero pads only (channels, border, flat tail) — no K^2 blowup ---
    x_pad = jnp.pad(x_nchw, ((0, 0), (0, CIN_P - Cin), (p, p), (p, p)))
    x_flat = x_pad.reshape(N, CIN_P, Hp * Wp)
    x_flat = jnp.pad(x_flat, ((0, 0), (0, 0), (0, QA - Hp * Wp))).astype(in_dtype)

    # Conv weights packed to match the slab row order (kh, kw, cin_pad); kept f32 (tiny).
    w_pad = jnp.pad(weight_oihw, ((0, 0), (0, CIN_P - Cin), (0, 0), (0, 0)))
    w2d = jnp.transpose(w_pad, (0, 2, 3, 1)).reshape(Cout, KKC).astype(jnp.float32)
    b2d = bias.reshape(Cout, 1).astype(jnp.float32)

    tap_offsets = tuple(kh * Wp + kw for kh in range(K) for kw in range(K))
    kernel = _make_conv_kernel(TS, CIN_P, tap_offsets)

    cost = pl.CostEstimate(
        flops=2 * N * QT * KKC * Cout,
        transcendentals=0,
        bytes_accessed=(N * CIN_P * (QT + num_tiles * TSH) * in_isz   # streamed input (+halo)
                        + Cout * KKC * 4 + Cout * 4                   # weights + bias
                        + N * Cout * QT * out_isz))                   # output

    out_flat = pl.pallas_call(
        kernel,
        out_shape=jax.ShapeDtypeStruct((N, Cout, QT), out_dtype),
        grid_spec=pltpu.PrefetchScalarGridSpec(
            num_scalar_prefetch=0,
            grid=(N, num_tiles),
            in_specs=[
                # main lane-dense spatial tile of the flattened padded image
                pl.BlockSpec((pl.Squeezed(), CIN_P, TS), lambda n, s: (n, 0, s)),
                # small staggered halo view of the SAME array: the TSH elements right
                # after the main tile (element offset (s+1)*TS = block (s+1)*RATIO)
                pl.BlockSpec((pl.Squeezed(), CIN_P, TSH),
                             lambda n, s: (n, 0, (s + 1) * RATIO)),
                # NOTE: for large Cout*KKC configs these two could use
                # pipeline_mode=pl.Buffered(1) (constant index maps); negligible here.
                pl.BlockSpec((Cout, KKC), lambda n, s: (0, 0)),
                pl.BlockSpec((Cout, 1), lambda n, s: (0, 0)),
            ],
            out_specs=pl.BlockSpec((pl.Squeezed(), Cout, TS), lambda n, s: (n, 0, s)),
            scratch_shapes=[
                pltpu.VMEM((CIN_P, TS + TSH), jnp.float32),   # staged main + halo
                pltpu.VMEM((KKC, TS), jnp.float32),           # im2col slab
            ],
        ),
        compiler_params=pltpu.CompilerParams(
            dimension_semantics=("parallel", "parallel"),
            vmem_limit_bytes=vmem_limit),
        cost_estimate=cost,
    )(x_flat, x_flat, w2d, b2d)

    # Crop the flat-padding tail and the K-1 wrap columns per row; contiguous reshape otherwise.
    out = out_flat[:, :, :Qo].reshape(N, Cout, Ho, Wp)[:, :, :, :Wo]
    return out


if __name__ == "__main__":
    # Small shapes consistent with the module: N=2, Cin=4, Cout=8, H=W=16, K=3.
    N, Cin, Cout, H, W, K = 2, 4, 8, 16, 16, 3

    key = jax.random.PRNGKey(0)
    kx, kw, kb = jax.random.split(key, 3)

    x = jax.random.normal(kx, (N, Cin, H, W), dtype=jnp.float32)
    # Deterministic synthetic params (PyTorch conv param shapes: OIHW weight, (Cout,) bias).
    fan_in = Cin * K * K
    bound = 1.0 / (fan_in ** 0.5)
    weight = jax.random.uniform(kw, (Cout, Cin, K, K), minval=-bound, maxval=bound,
                                dtype=jnp.float32)
    bias = jax.random.uniform(kb, (Cout,), minval=-bound, maxval=bound,
                              dtype=jnp.float32)

    out = bblock_forward(x, weight, bias, K)
    out = jax.block_until_ready(out)
    assert out.shape == (N, Cout, H, W)

    # Check vs XLA conv fed the same bf16-quantized input (kernel reads x as bf16, math in f32).
    x_q = x.astype(jnp.bfloat16).astype(jnp.float32)
    ref_q = lax.conv_general_dilated(
        x_q, weight, window_strides=(1, 1), padding=[(K // 2, K // 2)] * 2,
        dimension_numbers=("NCHW", "OIHW", "NCHW"),
        precision=lax.Precision.HIGHEST) + bias[None, :, None, None]
    assert jnp.allclose(out, ref_q, atol=1e-2, rtol=1e-2), "mismatch vs reference conv"

    # Loose sanity check vs the pure-f32 reference (bf16 input quantization only).
    ref_f32 = lax.conv_general_dilated(
        x, weight, window_strides=(1, 1), padding=[(K // 2, K // 2)] * 2,
        dimension_numbers=("NCHW", "OIHW", "NCHW"),
        precision=lax.Precision.HIGHEST) + bias[None, :, None, None]
    assert jnp.allclose(out, ref_f32, atol=5e-2, rtol=5e-2), "bf16 drift too large"

    print("KERNEL_OK")
</pallas_src>

<mosaic_0001>
module attributes {stable_mosaic.version = 11 : i64} {
  func.func @kernel(%arg0: i32, %arg1: i32, %arg2: memref<1x8x384xbf16, #tpu.memory_space<vmem>>, %arg3: memref<1x8x128xbf16, #tpu.memory_space<vmem>>, %arg4: memref<8x72xf32, #tpu.memory_space<vmem>>, %arg5: memref<8x1xf32, #tpu.memory_space<vmem>>, %arg6: memref<1x8x384xf32, #tpu.memory_space<vmem>>, %arg7: memref<8x512xf32, #tpu.memory_space<vmem>>, %arg8: memref<72x384xf32, #tpu.memory_space<vmem>>) attributes {dimension_semantics = [#tpu.dimension_semantics<parallel>, #tpu.dimension_semantics<parallel>], iteration_bounds = array<i64: 2, 1>, scalar_prefetch = 0 : i64, scratch_operands = 2 : i64, tpu.core_type = #tpu.core_type<tc>, window_params = [{transform_indices = @transform_0, window_bounds = array<i64: 1, 8, 384>}, {transform_indices = @transform_1, window_bounds = array<i64: 1, 8, 128>}, {pipeline_mode = #tpu.pipeline_mode<synchronous>, transform_indices = @transform_2, window_bounds = array<i64: 8, 72>}, {pipeline_mode = #tpu.pipeline_mode<synchronous>, transform_indices = @transform_3, window_bounds = array<i64: 8, 1>}, {transform_indices = @transform_4, window_bounds = array<i64: 1, 8, 384>}]} {
    %c0 = arith.constant 0 : index
    %c0_0 = arith.constant 0 : index
    %c0_1 = arith.constant 0 : index
    %0 = vector.load %arg2[%c0, %c0_0, %c0_1] : memref<1x8x384xbf16, #tpu.memory_space<vmem>>, vector<1x8x384xbf16>
    %1 = vector.shape_cast %0 : vector<1x8x384xbf16> to vector<8x384xbf16>
    %2 = arith.extf %1 : vector<8x384xbf16> to vector<8x384xf32>
    %c0_2 = arith.constant 0 : index
    %c0_3 = arith.constant 0 : index
    %3 = vector.load %arg7[%c0_2, %c0_3] : memref<8x512xf32, #tpu.memory_space<vmem>>, vector<8x384xf32>
    tpu.vector_store %arg7[%c0_2, %c0_3], %2 {strides = array<i32>} : memref<8x512xf32, #tpu.memory_space<vmem>>, vector<8x384xf32>,
    %c0_4 = arith.constant 0 : index
    %c0_5 = arith.constant 0 : index
    %c0_6 = arith.constant 0 : index
    %4 = vector.load %arg3[%c0_4, %c0_5, %c0_6] : memref<1x8x128xbf16, #tpu.memory_space<vmem>>, vector<1x8x128xbf16>
    %5 = vector.shape_cast %4 : vector<1x8x128xbf16> to vector<8x128xbf16>
    %6 = arith.extf %5 : vector<8x128xbf16> to vector<8x128xf32>
    %c0_7 = arith.constant 0 : index
    %c384 = arith.constant 384 : index
    %7 = vector.load %arg7[%c0_7, %c384] : memref<8x512xf32, #tpu.memory_space<vmem>>, vector<8x128xf32>
    tpu.vector_store %arg7[%c0_7, %c384], %6 {strides = array<i32>} : memref<8x512xf32, #tpu.memory_space<vmem>>, vector<8x128xf32>,
    %c0_8 = arith.constant 0 : index
    %c0_9 = arith.constant 0 : index
    %8 = vector.load %arg7[%c0_8, %c0_9] : memref<8x512xf32, #tpu.memory_space<vmem>>, vector<8x384xf32>
    %c0_10 = arith.constant 0 : index
    %c0_11 = arith.constant 0 : index
    %9 = vector.load %arg8[%c0_10, %c0_11] : memref<72x384xf32, #tpu.memory_space<vmem>>, vector<8x384xf32>
    tpu.vector_store %arg8[%c0_10, %c0_11], %8 {strides = array<i32>} : memref<72x384xf32, #tpu.memory_space<vmem>>, vector<8x384xf32>,
    %c0_12 = arith.constant 0 : index
    %c1 = arith.constant 1 : index
    %10 = vector.load %arg7[%c0_12, %c1] : memref<8x512xf32, #tpu.memory_space<vmem>>, vector<8x384xf32>
    %c8 = arith.constant 8 : index
    %c0_13 = arith.constant 0 : index
    %11 = vector.load %arg8[%c8, %c0_13] : memref<72x384xf32, #tpu.memory_space<vmem>>, vector<8x384xf32>
    tpu.vector_store %arg8[%c8, %c0_13], %10 {strides = array<i32>} : memref<72x384xf32, #tpu.memory_space<vmem>>, vector<8x384xf32>,
    %c0_14 = arith.constant 0 : index
    %c2 = arith.constant 2 : index
    %12 = vector.load %arg7[%c0_14, %c2] : memref<8x512xf32, #tpu.memory_space<vmem>>, vector<8x384xf32>
    %c16 = arith.constant 16 : index
    %c0_15 = arith.constant 0 : index
    %13 = vector.load %arg8[%c16, %c0_15] : memref<72x384xf32, #tpu.memory_space<vmem>>, vector<8x384xf32>
    tpu.vector_store %arg8[%c16, %c0_15], %12 {strides = array<i32>} : memref<72x384xf32, #tpu.memory_space<vmem>>, vector<8x384xf32>,
    %c0_16 = arith.constant 0 : index
    %c18 = arith.constant 18 : index
    %14 = vector.load %arg7[%c0_16, %c18] : memref<8x512xf32, #tpu.memory_space<vmem>>, vector<8x384xf32>
    %c24 = arith.constant 24 : index
    %c0_17 = arith.constant 0 : index
    %15 = vector.load %arg8[%c24, %c0_17] : memref<72x384xf32, #tpu.memory_space<vmem>>, vector<8x384xf32>
    tpu.vector_store %arg8[%c24, %c0_17], %14 {strides = array<i32>} : memref<72x384xf32, #tpu.memory_space<vmem>>, vector<8x384xf32>,
    %c0_18 = arith.constant 0 : index
    %c19 = arith.constant 19 : index
    %16 = vector.load %arg7[%c0_18, %c19] : memref<8x512xf32, #tpu.memory_space<vmem>>, vector<8x384xf32>
    %c32 = arith.constant 32 : index
    %c0_19 = arith.constant 0 : index
    %17 = vector.load %arg8[%c32, %c0_19] : memref<72x384xf32, #tpu.memory_space<vmem>>, vector<8x384xf32>
    tpu.vector_store %arg8[%c32, %c0_19], %16 {strides = array<i32>} : memref<72x384xf32, #tpu.memory_space<vmem>>, vector<8x384xf32>,
    %c0_20 = arith.constant 0 : index
    %c20 = arith.constant 20 : index
    %18 = vector.load %arg7[%c0_20, %c20] : memref<8x512xf32, #tpu.memory_space<vmem>>, vector<8x384xf32>
    %c40 = arith.constant 40 : index
    %c0_21 = arith.constant 0 : index
    %19 = vector.load %arg8[%c40, %c0_21] : memref<72x384xf32, #tpu.memory_space<vmem>>, vector<8x384xf32>
    tpu.vector_store %arg8[%c40, %c0_21], %18 {strides = array<i32>} : memref<72x384xf32, #tpu.memory_space<vmem>>, vector<8x384xf32>,
    %c0_22 = arith.constant 0 : index
    %c36 = arith.constant 36 : index
    %20 = vector.load %arg7[%c0_22, %c36] : memref<8x512xf32, #tpu.memory_space<vmem>>, vector<8x384xf32>
    %c48 = arith.constant 48 : index
    %c0_23 = arith.constant 0 : index
    %21 = vector.load %arg8[%c48, %c0_23] : memref<72x384xf32, #tpu.memory_space<vmem>>, vector<8x384xf32>
    tpu.vector_store %arg8[%c48, %c0_23], %20 {strides = array<i32>} : memref<72x384xf32, #tpu.memory_space<vmem>>, vector<8x384xf32>,
    %c0_24 = arith.constant 0 : index
    %c37 = arith.constant 37 : index
    %22 = vector.load %arg7[%c0_24, %c37] : memref<8x512xf32, #tpu.memory_space<vmem>>, vector<8x384xf32>
    %c56 = arith.constant 56 : index
    %c0_25 = arith.constant 0 : index
    %23 = vector.load %arg8[%c56, %c0_25] : memref<72x384xf32, #tpu.memory_space<vmem>>, vector<8x384xf32>
    tpu.vector_store %arg8[%c56, %c0_25], %22 {strides = array<i32>} : memref<72x384xf32, #tpu.memory_space<vmem>>, vector<8x384xf32>,
    %c0_26 = arith.constant 0 : index
    %c38 = arith.constant 38 : index
    %24 = vector.load %arg7[%c0_26, %c38] : memref<8x512xf32, #tpu.memory_space<vmem>>, vector<8x384xf32>
    %c64 = arith.constant 64 : index
    %c0_27 = arith.constant 0 : index
    %25 = vector.load %arg8[%c64, %c0_27] : memref<72x384xf32, #tpu.memory_space<vmem>>, vector<8x384xf32>
    tpu.vector_store %arg8[%c64, %c0_27], %24 {strides = array<i32>} : memref<72x384xf32, #tpu.memory_space<vmem>>, vector<8x384xf32>,
    %c0_28 = arith.constant 0 : index
    %c0_29 = arith.constant 0 : index
    %26 = vector.load %arg4[%c0_28, %c0_29] : memref<8x72xf32, #tpu.memory_space<vmem>>, vector<8x72xf32>
    %c0_30 = arith.constant 0 : index
    %c0_31 = arith.constant 0 : index
    %27 = vector.load %arg8[%c0_30, %c0_31] : memref<72x384xf32, #tpu.memory_space<vmem>>, vector<72x384xf32>
    %cst = arith.constant dense<0.000000e+00> : vector<8x384xf32>
    %28 = tpu.matmul %26, %27, %cst {dimension_numbers = #tpu.dot_dimension_numbers<[1], [0], [0], [1], [0, 0, 1, 1], [], []>} : vector<8x72xf32>, vector<72x384xf32>, vector<8x384xf32> -> vector<8x384xf32>
    %c0_32 = arith.constant 0 : index
    %c0_33 = arith.constant 0 : index
    %29 = vector.load %arg5[%c0_32, %c0_33] : memref<8x1xf32, #tpu.memory_space<vmem>>, vector<8x1xf32>
    %30 = vector.broadcast %29 : vector<8x1xf32> to vector<8x384xf32>
    %31 = arith.addf %28, %30 : vector<8x384xf32>
    %c0_34 = arith.constant 0 : index
    %c0_35 = arith.constant 0 : index
    %c0_36 = arith.constant 0 : index
    %32 = vector.load %arg6[%c0_34, %c0_35, %c0_36] : memref<1x8x384xf32, #tpu.memory_space<vmem>>, vector<1x8x384xf32>
    %33 = vector.shape_cast %32 : vector<1x8x384xf32> to vector<8x384xf32>
    %34 = vector.shape_cast %31 : vector<8x384xf32> to vector<1x8x384xf32>
    tpu.vector_store %arg6[%c0_34, %c0_35, %c0_36], %34 {strides = array<i32>} : memref<1x8x384xf32, #tpu.memory_space<vmem>>, vector<1x8x384xf32>,
    return
  }
  func.func @transform_0(%arg0: i32, %arg1: i32) -> (i32, i32, i32) {
    %c0_i32 = arith.constant 0 : i32
    %c0_i32_0 = arith.constant 0 : i32
    return %arg0, %c0_i32, %arg1 : i32, i32, i32
  }
  func.func @transform_1(%arg0: i32, %arg1: i32) -> (i32, i32, i32) {
    %c1_i32 = arith.constant 1 : i32
    %0 = arith.addi %arg1, %c1_i32 : i32
    %c3_i32 = arith.constant 3 : i32
    %1 = arith.muli %0, %c3_i32 : i32
    %c0_i32 = arith.constant 0 : i32
    %c0_i32_0 = arith.constant 0 : i32
    return %arg0, %c0_i32, %1 : i32, i32, i32
  }
  func.func @transform_2(%arg0: i32, %arg1: i32) -> (i32, i32) {
    %c0_i32 = arith.constant 0 : i32
    %c0_i32_0 = arith.constant 0 : i32
    %c0_i32_1 = arith.constant 0 : i32
    return %c0_i32, %c0_i32_0 : i32, i32
  }
  func.func @transform_3(%arg0: i32, %arg1: i32) -> (i32, i32) {
    %c0_i32 = arith.constant 0 : i32
    %c0_i32_0 = arith.constant 0 : i32
    %c0_i32_1 = arith.constant 0 : i32
    return %c0_i32, %c0_i32_0 : i32, i32
  }
  func.func @transform_4(%arg0: i32, %arg1: i32) -> (i32, i32, i32) {
    %c0_i32 = arith.constant 0 : i32
    %c0_i32_0 = arith.constant 0 : i32
    return %arg0, %c0_i32, %arg1 : i32, i32, i32
  }
}

</mosaic_0001>

<llo_original>
// kernel: tpu_custom_call.1
$region0: #{tpu_custom_call.1}
  #allocation0 [shape = 'u32[]', space=smem, size = 0x4, offset = 0x4, fixed_abs, tag = 'smem constant byte address 0x4 - core index']
  #allocation1 [shape = 'u32[144,128]{1,0:T(1,128)}', space=vmem, size = 0x12000, scoped, tag = 'internal scratch']
  #allocation2 [shape = 'f32[8,512]{1,0:T(8,128)}', space=vmem, size = 0x4000, scoped, tag = 'scratch operand']
  #allocation3 [shape = 'f32[72,384]{1,0:T(8,128)}', space=vmem, size = 0x1b000, scoped, tag = 'scratch operand']
  %s0 = inlined_call_operand.hbm [shape: bf16[2,8,768], index: 0, kind: input, shape index: {}]
  %s1 = inlined_call_operand.hbm [shape: bf16[2,8,768], index: 1, kind: input, shape index: {}]
  %s2 = inlined_call_operand.vmem [shape: f32[8,72], index: 2, kind: input, shape index: {}]
  %s3 = inlined_call_operand.vmem [shape: f32[8,1], index: 3, kind: input, shape index: {}]
  %s4 = inlined_call_operand.hbm [shape: f32[2,8,384], index: 4, kind: output, shape index: {}]
  %s5 = sld [smem:[#allocation0]]
  $region57: #{tpu_custom_call.1} parent=0
    _
  %s7 = ssub.s32 1, %s5
  %s8 = scalar_select 0, %s7, %s5
  $region1: #{tpu_custom_call.1} parent=0
    #allocation4 [shape = 'u8[12288]{0}', space=vmem, size = 0x3000, scoped, tag = 'input window, operand 0']
    #allocation5 [shape = 's32[2]{0}', space=sflag, size = 0x8, scoped, tag = 'scoped memory for tpu_custom_call.1']
    #allocation6 [shape = 's32[2]{0}', space=sflag, size = 0x8, scoped, tag = 'scoped memory for tpu_custom_call.1']
    #allocation7 [shape = 'u8[4096]{0}', space=vmem, size = 0x1000, scoped, tag = 'input window, operand 1']
    #allocation8 [shape = 's32[2]{0}', space=sflag, size = 0x8, scoped, tag = 'scoped memory for tpu_custom_call.1']
    #allocation9 [shape = 'u8[24576]{0}', space=vmem, size = 0x6000, scoped, tag = 'output window, operand 0']
    %9 = vsyncpa [#allocation5], 0
    %s10 = scalar_lea.sflag [#allocation5], 1
    %11 = vsyncpa %s10, 0
    %12 = vsyncpa [#allocation8], 0
    %s13 = scalar_lea.sflag [#allocation8], 1
    %14 = vsyncpa %s13, 0
    %15 = vsyncpa [#allocation6], 0
    %s16 = scalar_lea.sflag [#allocation6], 1
    %17 = vsyncpa %s16, 0
    loop: start=0, step=1, limit=4
    $region2: #{tpu_custom_call.1} parent=1 // loop_pre_header
      _
    $region3: #{tpu_custom_call.1} parent=1 // loop_header
      %s19 = sphi 0, %s23
      %p20 = scmp.ge.s32.totalorder %s19, 4
      %s26 = sphi 0, %s38
      %s27 = sphi 0, %s34
      %s28 = sphi 0, %s26
      %s29 = sphi 0, %s27
      %s30 = sphi 0, %s28
      %s31 = sphi 0, %s29
      %s43 = sphi 0, %s45
      %s46 = sphi 0, %s43
      %s47 = sphi 0, %s46
      %s63 = sphi 0, %s47
      %s75 = sphi 0, %s77
      %s78 = sphi 0, %s75
      %s79 = sphi 0, %s78
      %s95 = sphi 0, %s79
      %s99 = sphi 0, %s99
      %s101 = sphi 0, %s99
      %s102 = sphi 0, %s101
      %s116 = sphi 0, %s102
      %s120 = sphi 0, %s120
      %s122 = sphi 0, %s120
      %s123 = sphi 0, %s122
      %s137 = sphi 0, %s123
      %s145 = sphi 0, %s147
      %s148 = sphi 0, %s145
      %s149 = sphi 0, %s148
      %s165 = sphi 0, %s149
    $region4: #{tpu_custom_call.1} parent=1 // loop_header_branch
      %22 = sbr.rel (%p20) target = $region8
    $region5: #{tpu_custom_call.1} parent=1 // loop_body
      %s24 = ssub.s32 %s19, 1
      %s25 = ssub.s32 %s19, 2
      %s32 = sadd.s32 1, %s27
      %p33 = scmp.ge.s32.totalorder %s32, 1
      %s34 = scalar_select %p33, 0, %s32
      %s35 = sadd.s32 1, %s26
      %s36 = scalar_select %p33, %s35, %s26
      %p37 = scmp.ge.s32.totalorder %s36, 2
      %s38 = scalar_select %p37, 0, %s36
      %s39 = ssub.s32 %s26, %s38
      %s40 = ssub.s32 %s27, %s34
      %s41 = sor.u32 %s39, %s40
      %p42 = scmp.eq.s32.totalorder %s41, 0
      %s44 = sadd.s32 %s43, 1
      %s45 = scalar_select %p42, %s43, %s44
      %p48 = pneg %p42
      %p49 = scmp.eq.s32.totalorder %s19, 1
      %p50 = por %p48, %p49
      %p51 = scmp.ne.s32.totalorder %s43, %s46
      %p52 = scmp.eq.s32.totalorder %s19, 0
      %p53 = por %p51, %p52
      %p54 = scmp.ne.s32.totalorder %s43, %s46
      %p55 = scmp.eq.s32.totalorder %s24, 1
      %p56 = por %p54, %p55
      %p57 = scmp.ne.s32.totalorder %s46, %s47
      %p58 = scmp.eq.s32.totalorder %s24, 0
      %p59 = por %p57, %p58
      %p60 = scmp.ne.s32.totalorder %s46, %s47
      %p61 = scmp.eq.s32.totalorder %s25, 1
      %p62 = por %p60, %p61
      %p64 = scmp.ne.s32.totalorder %s47, %s63
      %p65 = scmp.eq.s32.totalorder %s25, 0
      %p66 = por %p64, %p65
      %s67 = sadd.s32 %s27, 1
      %s68 = smul.u32 %s67, 3
      %s69 = sadd.s32 %s34, 1
      %s70 = smul.u32 %s69, 3
      %s71 = ssub.s32 %s26, %s38
      %s72 = ssub.s32 %s68, %s70
      %s73 = sor.u32 %s71, %s72
      %p74 = scmp.eq.s32.totalorder %s73, 0
      %s76 = sadd.s32 %s75, 1
      %s77 = scalar_select %p74, %s75, %s76
      %p80 = pneg %p74
      %p81 = scmp.eq.s32.totalorder %s19, 1
      %p82 = por %p80, %p81
      %p83 = scmp.ne.s32.totalorder %s75, %s78
      %p84 = scmp.eq.s32.totalorder %s19, 0
      %p85 = por %p83, %p84
      %p86 = scmp.ne.s32.totalorder %s75, %s78
      %p87 = scmp.eq.s32.totalorder %s24, 1
      %p88 = por %p86, %p87
      %p89 = scmp.ne.s32.totalorder %s78, %s79
      %p90 = scmp.eq.s32.totalorder %s24, 0
      %p91 = por %p89, %p90
      %p92 = scmp.ne.s32.totalorder %s78, %s79
      %p93 = scmp.eq.s32.totalorder %s25, 1
      %p94 = por %p92, %p93
      %p96 = scmp.ne.s32.totalorder %s79, %s95
      %p97 = scmp.eq.s32.totalorder %s25, 0
      %p98 = por %p96, %p97
      %s100 = sadd.s32 %s99, 1
      %p103 = scmp.eq.s32.totalorder %s19, 1
      %p104 = scmp.ne.s32.totalorder %s99, %s101
      %p105 = scmp.eq.s32.totalorder %s19, 0
      %p106 = por %p104, %p105
      %p107 = scmp.ne.s32.totalorder %s99, %s101
      %p108 = scmp.eq.s32.totalorder %s24, 1
      %p109 = por %p107, %p108
      %p110 = scmp.ne.s32.totalorder %s101, %s102
      %p111 = scmp.eq.s32.totalorder %s24, 0
      %p112 = por %p110, %p111
      %p113 = scmp.ne.s32.totalorder %s101, %s102
      %p114 = scmp.eq.s32.totalorder %s25, 1
      %p115 = por %p113, %p114
      %p117 = scmp.ne.s32.totalorder %s102, %s116
      %p118 = scmp.eq.s32.totalorder %s25, 0
      %p119 = por %p117, %p118
      %s121 = sadd.s32 %s120, 1
      %p124 = scmp.eq.s32.totalorder %s19, 1
      %p125 = scmp.ne.s32.totalorder %s120, %s122
      %p126 = scmp.eq.s32.totalorder %s19, 0
      %p127 = por %p125, %p126
      %p128 = scmp.ne.s32.totalorder %s120, %s122
      %p129 = scmp.eq.s32.totalorder %s24, 1
      %p130 = por %p128, %p129
      %p131 = scmp.ne.s32.totalorder %s122, %s123
      %p132 = scmp.eq.s32.totalorder %s24, 0
      %p133 = por %p131, %p132
      %p134 = scmp.ne.s32.totalorder %s122, %s123
      %p135 = scmp.eq.s32.totalorder %s25, 1
      %p136 = por %p134, %p135
      %p138 = scmp.ne.s32.totalorder %s123, %s137
      %p139 = scmp.eq.s32.totalorder %s25, 0
      %p140 = por %p138, %p139
      %s141 = ssub.s32 %s26, %s38
      %s142 = ssub.s32 %s27, %s34
      %s143 = sor.u32 %s141, %s142
      %p144 = scmp.eq.s32.totalorder %s143, 0
      %s146 = sadd.s32 %s145, 1
      %s147 = scalar_select %p144, %s145, %s146
      %p150 = pneg %p144
      %p151 = scmp.eq.s32.totalorder %s19, 1
      %p152 = por %p150, %p151
      %p153 = scmp.ne.s32.totalorder %s145, %s148
      %p154 = scmp.eq.s32.totalorder %s19, 0
      %p155 = por %p153, %p154
      %p156 = scmp.ne.s32.totalorder %s145, %s148
      %p157 = scmp.eq.s32.totalorder %s24, 1
      %p158 = por %p156, %p157
      %p159 = scmp.ne.s32.totalorder %s148, %s149
      %p160 = scmp.eq.s32.totalorder %s24, 0
      %p161 = por %p159, %p160
      %p162 = scmp.ne.s32.totalorder %s148, %s149
      %p163 = scmp.eq.s32.totalorder %s25, 1
      %p164 = por %p162, %p163
      %p166 = scmp.ne.s32.totalorder %s149, %s165
      %p167 = scmp.eq.s32.totalorder %s25, 0
      %p168 = por %p166, %p167
      %p169 = scmp.le.s32.totalorder 1, %s19
      %p170 = scmp.lt.s32.totalorder %s19, 3
      %p171 = pnand %p169, %p170
      %p172 = pneg %p171
      // Predicated region
      $region9: #{tpu_custom_call.1} parent=5 // pred_check
        _
      $region10: #{tpu_custom_call.1} parent=5 // pred_check_branch
        %174 = sbr.rel (%p171) target = $region12
      $region11: #{tpu_custom_call.1} parent=5 // pred_region
        %s175 = ssub.s32 %s19, 1
        // Predicated region
        $region13: #{tpu_custom_call.1} parent=11 // pred_check
          %p176 = pneg %p112
        $region14: #{tpu_custom_call.1} parent=11 // pred_check_branch
          %178 = sbr.rel (%p176) target = $region16
        $region15: #{tpu_custom_call.1} parent=11 // pred_region
          _
        $region16: #{tpu_custom_call.1} parent=11 // pred_fallthru
          _
        // Predicated region
        $region17: #{tpu_custom_call.1} parent=11 // pred_check
          %p179 = pneg %p133
        $region18: #{tpu_custom_call.1} parent=11 // pred_check_branch
          %181 = sbr.rel (%p179) target = $region20
        $region19: #{tpu_custom_call.1} parent=11 // pred_region
          _
        $region20: #{tpu_custom_call.1} parent=11 // pred_fallthru
          _
      $region12: #{tpu_custom_call.1} parent=5 // pred_fallthru
        _
      %p182 = scmp.lt.s32.totalorder %s19, 2
      // Predicated region
      $region21: #{tpu_custom_call.1} parent=5 // pred_check
        %p183 = pneg %p182
      $region22: #{tpu_custom_call.1} parent=5 // pred_check_branch
        %185 = sbr.rel (%p183) target = $region24
      $region23: #{tpu_custom_call.1} parent=5 // pred_region
        // Predicated region
        $region25: #{tpu_custom_call.1} parent=23 // pred_check
          %p186 = pneg %p53
        $region26: #{tpu_custom_call.1} parent=23 // pred_check_branch
          %188 = sbr.rel (%p186) target = $region28
        $region27: #{tpu_custom_call.1} parent=23 // pred_region
          %s189 = sand.u32 %s43, 1
          %s190 = scalar_lea.sflag [#allocation5], %s189
          %s191 = sand.u32 %s43, 1
          %s192 = smul.addr %s191, 12
          %s193 = scalar_lea.vmem [#allocation4], %s192
          %s194 = smul.u32 3, %s27
          %s196 = ssub.s32 192, 192
          %197 = vsyncadd %s190, %s196
          %s198 = smul.addr %s26, 6
          %s199 = sadd.s32 %s194, %s198
          %s200 = smul.addr %s199, 64
          %s201 = scalar_lea.hbm %s0, %s200
          %s203 = sshll.u32 %s193, 4
          %s204 = int_to_ptr.vmem [resolvable:$true] %s203
          %206 = dma.hbm_to_vmem [thread:$0]  %s201, 192, %s204, %s190
        $region28: #{tpu_custom_call.1} parent=23 // pred_fallthru
          _
        // Predicated region
        $region29: #{tpu_custom_call.1} parent=23 // pred_check
          %p207 = pneg %p85
        $region30: #{tpu_custom_call.1} parent=23 // pred_check_branch
          %209 = sbr.rel (%p207) target = $region32
        $region31: #{tpu_custom_call.1} parent=23 // pred_region
          %s210 = sand.u32 %s75, 1
          %s211 = scalar_lea.sflag [#allocation8], %s210
          %s212 = sand.u32 %s75, 1
          %s213 = smul.addr %s212, 4
          %s214 = scalar_lea.vmem [#allocation7], %s213
          %s215 = sadd.s32 %s27, 1
          %s216 = smul.u32 %s215, 3
          %s218 = ssub.s32 64, 64
          %219 = vsyncadd %s211, %s218
          %s220 = smul.addr %s26, 6
          %s221 = sadd.s32 %s216, %s220
          %s222 = smul.addr %s221, 64
          %s223 = scalar_lea.hbm %s1, %s222
          %s225 = sshll.u32 %s214, 4
          %s226 = int_to_ptr.vmem [resolvable:$true] %s225
          %228 = dma.hbm_to_vmem [thread:$0]  %s223, 64, %s226, %s211
        $region32: #{tpu_custom_call.1} parent=23 // pred_fallthru
          _
      $region24: #{tpu_custom_call.1} parent=5 // pred_fallthru
        _
      %p229 = scmp.le.s32.totalorder 1, %s19
      %p230 = scmp.lt.s32.totalorder %s19, 3
      %p231 = pnand %p229, %p230
      %p232 = pneg %p231
      // Predicated region
      $region33: #{tpu_custom_call.1} parent=5 // pred_check
        _
      $region34: #{tpu_custom_call.1} parent=5 // pred_check_branch
        %234 = sbr.rel (%p231) target = $region36
      $region35: #{tpu_custom_call.1} parent=5 // pred_region
        %s235 = ssub.s32 %s19, 1
        %s236 = sand.u32 %s46, 1
        %s237 = scalar_lea.sflag [#allocation5], %s236
        %s238 = sand.u32 %s46, 1
        %s239 = smul.addr %s238, 12
        %s240 = scalar_lea.vmem [#allocation4], %s239
        // Predicated region
        $region37: #{tpu_custom_call.1} parent=35 // pred_check
          %p241 = pneg %p59
        $region38: #{tpu_custom_call.1} parent=35 // pred_check_branch
          %243 = sbr.rel (%p241) target = $region40
        $region39: #{tpu_custom_call.1} parent=35 // pred_region
          %244 = dma.done %s237, 192
        $region40: #{tpu_custom_call.1} parent=35 // pred_fallthru
          _
        %s245 = sand.u32 %s78, 1
        %s246 = scalar_lea.sflag [#allocation8], %s245
        %s247 = sand.u32 %s78, 1
        %s248 = smul.addr %s247, 4
        %s249 = scalar_lea.vmem [#allocation7], %s248
        // Predicated region
        $region41: #{tpu_custom_call.1} parent=35 // pred_check
          %p250 = pneg %p91
        $region42: #{tpu_custom_call.1} parent=35 // pred_check_branch
          %252 = sbr.rel (%p250) target = $region44
        $region43: #{tpu_custom_call.1} parent=35 // pred_region
          %253 = dma.done %s246, 64
        $region44: #{tpu_custom_call.1} parent=35 // pred_fallthru
          _
        %s254 = sand.u32 %s46, 1
        %s255 = scalar_lea.sflag [#allocation5], %s254
        %s256 = sand.u32 %s46, 1
        %s257 = smul.addr %s256, 12
        %s258 = scalar_lea.vmem [#allocation4], %s257
        %p259 = pneg %p59
        %p260 = pneg %p56
        %s261 = sand.u32 %s78, 1
        %s262 = scalar_lea.sflag [#allocation8], %s261
        %s263 = sand.u32 %s78, 1
        %s264 = smul.addr %s263, 4
        %s265 = scalar_lea.vmem [#allocation7], %s264
        %p266 = pneg %p91
        %p267 = pneg %p88
        %p268 = pneg %p112
        %p269 = pneg %p109
        %p270 = pneg %p133
        %p271 = pneg %p130
        %p272 = pneg %p161
        %p273 = pneg %p158
        %s274 = sand.u32 %s148, 1
        %s275 = scalar_lea.sflag [#allocation6], %s274
        %s276 = sand.u32 %s148, 1
        %s277 = smul.addr %s276, 24
        %s278 = scalar_lea.vmem [#allocation9], %s277
        %s279 = smul.u32 3, %s29
        %s280 = sadd.s32 %s29, 1
        %s281 = smul.u32 %s280, 3
        %s282 = smul.u32 3, %s29
        %v283 = vld [vmem:[%s240] sm:$0xff]
        %v284 = vld [vmem:[%s240 + $0x8] sm:$0xf]
        %v285 = vunpack.c.l.bf16 %v283
        %v286 = vunpack.c.h.bf16 %v283
        %v287 = vunpack.c.l.bf16 %v284
        %288 = vst [vmem:[#allocation2] sm:$0xff] %v285
        %289 = vst [vmem:[#allocation2 + $0x8] sm:$0xff] %v286
        %290 = vst [vmem:[#allocation2 + $0x10] sm:$0xff] %v287
        %v291 = vld [vmem:[%s249] sm:$0xf]
        %v292 = vunpack.c.l.bf16 %v291
        %293 = vst [vmem:[#allocation2 + $0x18] sm:$0xff] %v292
        %v294 = vld [vmem:[#allocation2] sm:$0xff]
        %v295 = vld [vmem:[#allocation2 + $0x8] sm:$0xff]
        %v296 = vld [vmem:[#allocation2 + $0x10] sm:$0xff]
        %297 = vst [vmem:[#allocation3] sm:$0xff] %v294
        %298 = vst [vmem:[#allocation3 + $0x8] sm:$0xff] %v295
        %299 = vst [vmem:[#allocation3 + $0x10] sm:$0xff] %v296
        %v300 = vld [vmem:[#allocation2] sm:$0xff]
        %v301 = vld [vmem:[#allocation2 + $0x8] sm:$0xff]
        %v302 = vld [vmem:[#allocation2 + $0x10] sm:$0xff]
        %v303 = vld [vmem:[#allocation2 + $0x18] sm:$0xff]
        %308 = vrot.lane.b32.xlu0 %v300, 127
        %v309 = vpop.permute.xlu0 %308
        %310 = vrot.lane.b32.xlu0 %v301, 127
        %v311 = vpop.permute.xlu0 %310
        %312 = vrot.lane.b32.xlu0 %v302, 127
        %v313 = vpop.permute.xlu0 %312
        %314 = vrot.lane.b32.xlu0 %v303, 127
        %v315 = vpop.permute.xlu0 %314
        %vm316 = vcmask 1039360
        %v317 = vsel %vm316, %v309, %v311
        %v318 = vsel %vm316, %v311, %v313
        %v319 = vsel %vm316, %v313, %v315
        %323 = vst [vmem:[#allocation3 + $0x18] sm:$0xff] %v317
        %324 = vst [vmem:[#allocation3 + $0x20] sm:$0xff] %v318
        %325 = vst [vmem:[#allocation3 + $0x28] sm:$0xff] %v319
        %v326 = vld [vmem:[#allocation2] sm:$0xff]
        %v327 = vld [vmem:[#allocation2 + $0x8] sm:$0xff]
        %v328 = vld [vmem:[#allocation2 + $0x10] sm:$0xff]
        %v329 = vld [vmem:[#allocation2 + $0x18] sm:$0xff]
        %334 = vrot.lane.b32.xlu0 %v326, 126
        %v335 = vpop.permute.xlu0 %334
        %336 = vrot.lane.b32.xlu0 %v327, 126
        %v337 = vpop.permute.xlu0 %336
        %338 = vrot.lane.b32.xlu0 %v328, 126
        %v339 = vpop.permute.xlu0 %338
        %340 = vrot.lane.b32.xlu0 %v329, 126
        %v341 = vpop.permute.xlu0 %340
        %vm342 = vcmask 1031168
        %v343 = vsel %vm342, %v335, %v337
        %v344 = vsel %vm342, %v337, %v339
        %v345 = vsel %vm342, %v339, %v341
        %349 = vst [vmem:[#allocation3 + $0x30] sm:$0xff] %v343
        %350 = vst [vmem:[#allocation3 + $0x38] sm:$0xff] %v344
        %351 = vst [vmem:[#allocation3 + $0x40] sm:$0xff] %v345
        %v352 = vld [vmem:[#allocation2] sm:$0xff]
        %v353 = vld [vmem:[#allocation2 + $0x8] sm:$0xff]
        %v354 = vld [vmem:[#allocation2 + $0x10] sm:$0xff]
        %v355 = vld [vmem:[#allocation2 + $0x18] sm:$0xff]
        %360 = vrot.lane.b32.xlu0 %v352, 110
        %v361 = vpop.permute.xlu0 %360
        %362 = vrot.lane.b32.xlu0 %v353, 110
        %v363 = vpop.permute.xlu0 %362
        %364 = vrot.lane.b32.xlu0 %v354, 110
        %v365 = vpop.permute.xlu0 %364
        %366 = vrot.lane.b32.xlu0 %v355, 110
        %v367 = vpop.permute.xlu0 %366
        %vm368 = vcmask 900096
        %v369 = vsel %vm368, %v361, %v363
        %v370 = vsel %vm368, %v363, %v365
        %v371 = vsel %vm368, %v365, %v367
        %375 = vst [vmem:[#allocation3 + $0x48] sm:$0xff] %v369
        %376 = vst [vmem:[#allocation3 + $0x50] sm:$0xff] %v370
        %377 = vst [vmem:[#allocation3 + $0x58] sm:$0xff] %v371
        %v378 = vld [vmem:[#allocation2] sm:$0xff]
        %v379 = vld [vmem:[#allocation2 + $0x8] sm:$0xff]
        %v380 = vld [vmem:[#allocation2 + $0x10] sm:$0xff]
        %v381 = vld [vmem:[#allocation2 + $0x18] sm:$0xff]
        %386 = vrot.lane.b32.xlu0 %v378, 109
        %v387 = vpop.permute.xlu0 %386
        %388 = vrot.lane.b32.xlu0 %v379, 109
        %v389 = vpop.permute.xlu0 %388
        %390 = vrot.lane.b32.xlu0 %v380, 109
        %v391 = vpop.permute.xlu0 %390
        %392 = vrot.lane.b32.xlu0 %v381, 109
        %v393 = vpop.permute.xlu0 %392
        %vm394 = vcmask 891904
        %v395 = vsel %vm394, %v387, %v389
        %v396 = vsel %vm394, %v389, %v391
        %v397 = vsel %vm394, %v391, %v393
        %401 = vst [vmem:[#allocation3 + $0x60] sm:$0xff] %v395
        %402 = vst [vmem:[#allocation3 + $0x68] sm:$0xff] %v396
        %403 = vst [vmem:[#allocation3 + $0x70] sm:$0xff] %v397
        %v404 = vld [vmem:[#allocation2] sm:$0xff]
        %v405 = vld [vmem:[#allocation2 + $0x8] sm:$0xff]
        %v406 = vld [vmem:[#allocation2 + $0x10] sm:$0xff]
        %v407 = vld [vmem:[#allocation2 + $0x18] sm:$0xff]
        %412 = vrot.lane.b32.xlu0 %v404, 108
        %v413 = vpop.permute.xlu0 %412
        %414 = vrot.lane.b32.xlu0 %v405, 108
        %v415 = vpop.permute.xlu0 %414
        %416 = vrot.lane.b32.xlu0 %v406, 108
        %v417 = vpop.permute.xlu0 %416
        %418 = vrot.lane.b32.xlu0 %v407, 108
        %v419 = vpop.permute.xlu0 %418
        %vm420 = vcmask 883712
        %v421 = vsel %vm420, %v413, %v415
        %v422 = vsel %vm420, %v415, %v417
        %v423 = vsel %vm420, %v417, %v419
        %427 = vst [vmem:[#allocation3 + $0x78] sm:$0xff] %v421
        %428 = vst [vmem:[#allocation3 + $0x80] sm:$0xff] %v422
        %429 = vst [vmem:[#allocation3 + $0x88] sm:$0xff] %v423
        %v430 = vld [vmem:[#allocation2] sm:$0xff]
        %v431 = vld [vmem:[#allocation2 + $0x8] sm:$0xff]
        %v432 = vld [vmem:[#allocation2 + $0x10] sm:$0xff]
        %v433 = vld [vmem:[#allocation2 + $0x18] sm:$0xff]
        %438 = vrot.lane.b32.xlu0 %v430, 92
        %v439 = vpop.permute.xlu0 %438
        %440 = vrot.lane.b32.xlu0 %v431, 92
        %v441 = vpop.permute.xlu0 %440
        %442 = vrot.lane.b32.xlu0 %v432, 92
        %v443 = vpop.permute.xlu0 %442
        %444 = vrot.lane.b32.xlu0 %v433, 92
        %v445 = vpop.permute.xlu0 %444
        %vm446 = vcmask 752640
        %v447 = vsel %vm446, %v439, %v441
        %v448 = vsel %vm446, %v441, %v443
        %v449 = vsel %vm446, %v443, %v445
        %453 = vst [vmem:[#allocation3 + $0x90] sm:$0xff] %v447
        %454 = vst [vmem:[#allocation3 + $0x98] sm:$0xff] %v448
        %455 = vst [vmem:[#allocation3 + $0xa0] sm:$0xff] %v449
        %v456 = vld [vmem:[#allocation2] sm:$0xff]
        %v457 = vld [vmem:[#allocation2 + $0x8] sm:$0xff]
        %v458 = vld [vmem:[#allocation2 + $0x10] sm:$0xff]
        %v459 = vld [vmem:[#allocation2 + $0x18] sm:$0xff]
        %464 = vrot.lane.b32.xlu0 %v456, 91
        %v465 = vpop.permute.xlu0 %464
        %466 = vrot.lane.b32.xlu0 %v457, 91
        %v467 = vpop.permute.xlu0 %466
        %468 = vrot.lane.b32.xlu0 %v458, 91
        %v469 = vpop.permute.xlu0 %468
        %470 = vrot.lane.b32.xlu0 %v459, 91
        %v471 = vpop.permute.xlu0 %470
        %vm472 = vcmask 744448
        %v473 = vsel %vm472, %v465, %v467
        %v474 = vsel %vm472, %v467, %v469
        %v475 = vsel %vm472, %v469, %v471
        %479 = vst [vmem:[#allocation3 + $0xa8] sm:$0xff] %v473
        %480 = vst [vmem:[#allocation3 + $0xb0] sm:$0xff] %v474
        %481 = vst [vmem:[#allocation3 + $0xb8] sm:$0xff] %v475
        %v482 = vld [vmem:[#allocation2] sm:$0xff]
        %v483 = vld [vmem:[#allocation2 + $0x8] sm:$0xff]
        %v484 = vld [vmem:[#allocation2 + $0x10] sm:$0xff]
        %v485 = vld [vmem:[#allocation2 + $0x18] sm:$0xff]
        %490 = vrot.lane.b32.xlu0 %v482, 90
        %v491 = vpop.permute.xlu0 %490
        %492 = vrot.lane.b32.xlu0 %v483, 90
        %v493 = vpop.permute.xlu0 %492
        %494 = vrot.lane.b32.xlu0 %v484, 90
        %v495 = vpop.permute.xlu0 %494
        %496 = vrot.lane.b32.xlu0 %v485, 90
        %v497 = vpop.permute.xlu0 %496
        %vm498 = vcmask 736256
        %v499 = vsel %vm498, %v491, %v493
        %v500 = vsel %vm498, %v493, %v495
        %v501 = vsel %vm498, %v495, %v497
        %505 = vst [vmem:[#allocation3 + $0xc0] sm:$0xff] %v499
        %506 = vst [vmem:[#allocation3 + $0xc8] sm:$0xff] %v500
        %507 = vst [vmem:[#allocation3 + $0xd0] sm:$0xff] %v501
        %v508 = vld [vmem:[%s2] sm:$0xff]
        %v509 = vld [vmem:[#allocation3] sm:$0xff]
        %v510 = vld [vmem:[#allocation3 + $0x8] sm:$0xff]
        %v511 = vld [vmem:[#allocation3 + $0x10] sm:$0xff]
        %v512 = vld [vmem:[#allocation3 + $0x18] sm:$0xff]
        %v513 = vld [vmem:[#allocation3 + $0x20] sm:$0xff]
        %v514 = vld [vmem:[#allocation3 + $0x28] sm:$0xff]
        %v515 = vld [vmem:[#allocation3 + $0x30] sm:$0xff]
        %v516 = vld [vmem:[#allocation3 + $0x38] sm:$0xff]
        %v517 = vld [vmem:[#allocation3 + $0x40] sm:$0xff]
        %v518 = vld [vmem:[#allocation3 + $0x48] sm:$0xff]
        %v519 = vld [vmem:[#allocation3 + $0x50] sm:$0xff]
        %v520 = vld [vmem:[#allocation3 + $0x58] sm:$0xff]
        %v521 = vld [vmem:[#allocation3 + $0x60] sm:$0xff]
        %v522 = vld [vmem:[#allocation3 + $0x68] sm:$0xff]
        %v523 = vld [vmem:[#allocation3 + $0x70] sm:$0xff]
        %v524 = vld [vmem:[#allocation3 + $0x78] sm:$0xff]
        %v525 = vld [vmem:[#allocation3 + $0x80] sm:$0xff]
        %v526 = vld [vmem:[#allocation3 + $0x88] sm:$0xff]
        %v527 = vld [vmem:[#allocation3 + $0x90] sm:$0xff]
        %v528 = vld [vmem:[#allocation3 + $0x98] sm:$0xff]
        %v529 = vld [vmem:[#allocation3 + $0xa0] sm:$0xff]
        %v530 = vld [vmem:[#allocation3 + $0xa8] sm:$0xff]
        %v531 = vld [vmem:[#allocation3 + $0xb0] sm:$0xff]
        %v532 = vld [vmem:[#allocation3 + $0xb8] sm:$0xff]
        %v533 = vld [vmem:[#allocation3 + $0xc0] sm:$0xff]
        %v534 = vld [vmem:[#allocation3 + $0xc8] sm:$0xff]
        %v535 = vld [vmem:[#allocation3 + $0xd0] sm:$0xff]
        %v536 = vld [vmem:[%s3] sm:$0xff]
        %538 = vset.pattern.permute.xlu0 0
        %539 = vperm.xlu0 %538, %v536
        %v540 = vpop.permute.xlu0 %539
        %vm542 = vcmask 588800
        %v544 = vsel %vm542, %v508, 0
        %546 = vmatprep.subr.mxu0 %v510
        %547 = vmatpush1.msra.mxu0 %v509
        %548 = vmatprep.subr.mxu0 %v513
        %549 = vmatpush1.msra.mxu0 %v512
        %550 = vmatprep.subr.mxu0 %v516
        %551 = vmatpush1.msra.mxu0 %v515
        %552 = vmatprep.subr.mxu0 %v519
        %553 = vmatpush1.msra.mxu0 %v518
        %554 = vmatprep.subr.mxu0 %v522
        %555 = vmatpush1.msra.mxu0 %v521
        %556 = vmatprep.subr.mxu0 %v525
        %557 = vmatpush1.msra.mxu0 %v524
        %558 = vmatprep.subr.mxu0 %v528
        %559 = vmatpush1.msra.mxu0 %v527
        %560 = vmatprep.subr.mxu0 %v531
        %561 = vmatpush1.msra.mxu0 %v530
        %562 = vmatprep.subr.mxu0 %v534
        %563 = vmatpush1.msra.mxu0 %v533
        %564 = vmatprep.subr.mxu0 0.0
        %565 = vmatpush1.msra.mxu0 0.0
        %566 = vmatprep.subr.mxu0 0.0
        %567 = vmatpush1.msra.mxu0 0.0
        %568 = vmatprep.subr.mxu0 0.0
        %569 = vmatpush1.msra.mxu0 0.0
        %570 = vmatprep.subr.mxu0 0.0
        %571 = vmatpush1.msra.mxu0 0.0
        %572 = vmatprep.subr.mxu0 0.0
        %573 = vmatpush1.msra.mxu0 0.0
        %574 = vmatprep.subr.mxu0 0.0
        %575 = vmatpush1.msra.mxu0 0.0
        %576 = vmatprep.subr.mxu0 0.0
        %577 = vmatpush1.msra.mxu0 0.0
        %578 = vmatprep.subr.mxu0 0.0
        %579 = vmatpush1.msra.mxu0 0.0
        %580 = vmatprep.subr.mxu0 0.0
        %581 = vmatpush1.msra.mxu0 0.0
        %582 = vmatprep.subr.mxu0 0.0
        %583 = vmatpush1.msra.mxu0 0.0
        %584 = vmatprep.subr.mxu0 0.0
        %585 = vmatpush1.msra.mxu0 0.0
        %586 = vmatprep.subr.mxu0 0.0
        %587 = vmatpush1.msra.mxu0 0.0
        %588 = vmatprep.subr.mxu0 0.0
        %589 = vmatpush1.msra.mxu0 0.0
        %590 = vmatprep.subr.mxu0 0.0
        %591 = vmatpush1.msra.mxu0 0.0
        %592 = vmatprep.subr.mxu0 0.0
        %593 = vmatpush1.msra.mxu0 0.0
        %594 = vmatprep.subr.mxu0 0.0
        %595 = vmatpush1.msra.mxu0 0.0
        %596 = vmatprep.subr.mxu0 0.0
        %597 = vmatpush1.msra.mxu0 0.0
        %598 = vmatprep.subr.mxu0 0.0
        %599 = vmatpush1.msra.mxu0 0.0
        %600 = vmatprep.subr.mxu0 0.0
        %601 = vmatpush1.msra.mxu0 0.0
        %602 = vmatprep.subr.mxu0 0.0
        %603 = vmatpush1.msra.mxu0 0.0
        %604 = vmatprep.subr.mxu0 0.0
        %605 = vmatpush1.msra.mxu0 0.0
        %606 = vmatprep.subr.mxu0 0.0
        %607 = vmatpush1.msra.mxu0 0.0
        %608 = vmatprep.subr.mxu0 0.0
        %609 = vmatpush1.msra.mxu0 0.0
        %610 = vmatprep.mubr.f32.mxu0 0.0
        %611 = vmatmul.mubr.f32.gmra.mrb[0].mxu0 %v544
        %v612 = vpop.f32.mrb[0].mxu0
        %v613 = vadd.f32 %v540, %v612
        %v614 = vpop.f32.mrb[0].mxu0
        %v615 = vadd.f32 %v540, %v614
        %616 = vdwg.mxu0
        %617 = vmatprep.subr.mxu0 0.0
        %618 = vmatpush1.msra.mxu0 %v511
        %619 = vmatprep.subr.mxu0 0.0
        %620 = vmatpush1.msra.mxu0 %v514
        %621 = vmatprep.subr.mxu0 0.0
        %622 = vmatpush1.msra.mxu0 %v517
        %623 = vmatprep.subr.mxu0 0.0
        %624 = vmatpush1.msra.mxu0 %v520
        %625 = vmatprep.subr.mxu0 0.0
        %626 = vmatpush1.msra.mxu0 %v523
        %627 = vmatprep.subr.mxu0 0.0
        %628 = vmatpush1.msra.mxu0 %v526
        %629 = vmatprep.subr.mxu0 0.0
        %630 = vmatpush1.msra.mxu0 %v529
        %631 = vmatprep.subr.mxu0 0.0
        %632 = vmatpush1.msra.mxu0 %v532
        %633 = vmatprep.subr.mxu0 0.0
        %634 = vmatpush1.msra.mxu0 %v535
        %635 = vmatprep.subr.mxu0 0.0
        %636 = vmatpush1.msra.mxu0 0.0
        %637 = vmatprep.subr.mxu0 0.0
        %638 = vmatpush1.msra.mxu0 0.0
        %639 = vmatprep.subr.mxu0 0.0
        %640 = vmatpush1.msra.mxu0 0.0
        %641 = vmatprep.subr.mxu0 0.0
        %642 = vmatpush1.msra.mxu0 0.0
        %643 = vmatprep.subr.mxu0 0.0
        %644 = vmatpush1.msra.mxu0 0.0
        %645 = vmatprep.subr.mxu0 0.0
        %646 = vmatpush1.msra.mxu0 0.0
        %647 = vmatprep.subr.mxu0 0.0
        %648 = vmatpush1.msra.mxu0 0.0
        %649 = vmatprep.subr.mxu0 0.0
        %650 = vmatpush1.msra.mxu0 0.0
        %651 = vmatprep.subr.mxu0 0.0
        %652 = vmatpush1.msra.mxu0 0.0
        %653 = vmatprep.subr.mxu0 0.0
        %654 = vmatpush1.msra.mxu0 0.0
        %655 = vmatprep.subr.mxu0 0.0
        %656 = vmatpush1.msra.mxu0 0.0
        %657 = vmatprep.subr.mxu0 0.0
        %658 = vmatpush1.msra.mxu0 0.0
        %659 = vmatprep.subr.mxu0 0.0
        %660 = vmatpush1.msra.mxu0 0.0
        %661 = vmatprep.subr.mxu0 0.0
        %662 = vmatpush1.msra.mxu0 0.0
        %663 = vmatprep.subr.mxu0 0.0
        %664 = vmatpush1.msra.mxu0 0.0
        %665 = vmatprep.subr.mxu0 0.0
        %666 = vmatpush1.msra.mxu0 0.0
        %667 = vmatprep.subr.mxu0 0.0
        %668 = vmatpush1.msra.mxu0 0.0
        %669 = vmatprep.subr.mxu0 0.0
        %670 = vmatpush1.msra.mxu0 0.0
        %671 = vmatprep.subr.mxu0 0.0
        %672 = vmatpush1.msra.mxu0 0.0
        %673 = vmatprep.subr.mxu0 0.0
        %674 = vmatpush1.msra.mxu0 0.0
        %675 = vmatprep.subr.mxu0 0.0
        %676 = vmatpush1.msra.mxu0 0.0
        %677 = vmatprep.subr.mxu0 0.0
        %678 = vmatpush1.msra.mxu0 0.0
        %679 = vmatprep.subr.mxu0 0.0
        %680 = vmatpush1.msra.mxu0 0.0
        %681 = vmatprep.mubr.f32.mxu0 0.0
        %682 = vmatmul.mubr.f32.gmra.mrb[0].mxu0 %v544
        %v683 = vpop.f32.mrb[0].mxu0
        %v684 = vadd.f32 %v540, %v683
        %v685 = vpop.f32.mrb[0].mxu0
        %686 = vdwg.mxu0
        %687 = vst [vmem:[%s278] sm:$0xff] %v613
        %688 = vst [vmem:[%s278 + $0x8] sm:$0xff] %v615
        %689 = vst [vmem:[%s278 + $0x10] sm:$0xff] %v684
        %s690 = sand.u32 %s148, 1
        %s691 = scalar_lea.sflag [#allocation6], %s690
        %s692 = sand.u32 %s148, 1
        %s693 = smul.addr %s692, 24
        %s694 = scalar_lea.vmem [#allocation9], %s693
        // Predicated region
        $region45: #{tpu_custom_call.1} parent=35 // pred_check
          %p695 = pneg %p158
        $region46: #{tpu_custom_call.1} parent=35 // pred_check_branch
          %697 = sbr.rel (%p695) target = $region48
        $region47: #{tpu_custom_call.1} parent=35 // pred_region
          %s698 = smul.u32 3, %s29
          %s700 = ssub.s32 384, 384
          %701 = vsyncadd %s691, %s700
          %s702 = smul.addr %s28, 3
          %s703 = sadd.s32 %s698, %s702
          %s704 = smul.addr %s703, 128
          %s705 = scalar_lea.hbm %s4, %s704
          %s707 = sshll.u32 %s694, 4
          %s708 = int_to_ptr.vmem [resolvable:$true] %s707
          %710 = dma.vmem_to_hbm [thread:$0]  %s708, 384, %s705, %s691
        $region48: #{tpu_custom_call.1} parent=35 // pred_fallthru
          _
      $region36: #{tpu_custom_call.1} parent=5 // pred_fallthru
        _
      %p711 = scmp.le.s32.totalorder 2, %s19
      // Predicated region
      $region49: #{tpu_custom_call.1} parent=5 // pred_check
        %p712 = pneg %p711
      $region50: #{tpu_custom_call.1} parent=5 // pred_check_branch
        %714 = sbr.rel (%p712) target = $region52
      $region51: #{tpu_custom_call.1} parent=5 // pred_region
        %s715 = ssub.s32 %s19, 2
        // Predicated region
        $region53: #{tpu_custom_call.1} parent=51 // pred_check
          %p716 = pneg %p164
        $region54: #{tpu_custom_call.1} parent=51 // pred_check_branch
          %718 = sbr.rel (%p716) target = $region56
        $region55: #{tpu_custom_call.1} parent=51 // pred_region
          %s719 = sand.u32 %s149, 1
          %s720 = scalar_lea.sflag [#allocation6], %s719
          %s721 = sand.u32 %s149, 1
          %s722 = smul.addr %s721, 24
          %s723 = scalar_lea.vmem [#allocation9], %s722
          %724 = dma.done %s720, 384
        $region56: #{tpu_custom_call.1} parent=51 // pred_fallthru
          _
      $region52: #{tpu_custom_call.1} parent=5 // pred_fallthru
        _
    $region6: #{tpu_custom_call.1} parent=1 // loop_footer
      %s23 = sadd.s32 1, %s19
    $region7: #{tpu_custom_call.1} parent=1 // loop_footer_branch
      %18 = sbr.rel target = $region3
    $region8: #{tpu_custom_call.1} parent=1 // loop_exit
      _
    %725 = vsyncpa [#allocation5], 1
    %s726 = scalar_lea.sflag [#allocation5], 1
    %727 = vsyncpa %s726, 1
    %728 = vsyncpa [#allocation8], 1
    %s729 = scalar_lea.sflag [#allocation8], 1
    %730 = vsyncpa %s729, 1
    %731 = vsyncpa [#allocation6], 1
    %s732 = scalar_lea.sflag [#allocation6], 1
    %733 = vsyncpa %s732, 1

</llo_original>
